<compile_context>
chip_gen: v7x
topology: tpu7x:2x2x1
jax: 0.10.0
libtpu: 0.0.40
codegen_flags: <defaults>
</compile_context>

<pallas_src>
import functools

import jax
import jax.numpy as jnp
from jax.experimental import pallas as pl
from jax.experimental.pallas import tpu as pltpu

LANE = 128      # vreg lane width
SUBLANE = 8     # vreg sublane count (f32)
OUT_PAD = 8     # narrow output width stored by the kernel (2 real cols + pad)


def _round_up(n, m):
    return ((n + m - 1) // m) * m


# ---------------------------------------------------------------------------
# Kernel
# ---------------------------------------------------------------------------
def fcca_kernel(x_ref, w_ref, b_ref, o_ref, *, in_pad, hid_pad, out_pad):
    """One batch tile of the 3-layer MLP (pre-activation output).

    x_ref : (TB, in_pad)                      activation tile (pipelined)
    w_ref : (in_pad + 2*hid_pad, hid_pad)     [W0; W1; W2] packed, VMEM-resident
    b_ref : (8, hid_pad)                      rows 0/1/2 = b0/b1/b2, VMEM-resident
    o_ref : (TB, out_pad)                     raw z, only cols [:2] are real
    """
    x = x_ref[...]

    w0 = w_ref[0:in_pad, :]
    w1 = w_ref[in_pad:in_pad + hid_pad, :]
    w2 = w_ref[in_pad + hid_pad:in_pad + 2 * hid_pad, :]
    b0 = b_ref[0:1, :]
    b1 = b_ref[1:2, :]
    b2 = b_ref[2:3, :]

    # layer 0: Linear + ReLU
    h0 = jnp.dot(x, w0, preferred_element_type=jnp.float32) + b0
    h0 = jnp.maximum(h0, 0.0)

    # layer 1: Linear + ReLU
    h1 = jnp.dot(h0, w1, preferred_element_type=jnp.float32) + b1
    h1 = jnp.maximum(h1, 0.0)

    # layer 2: Linear only; 1 + softplus epilogue is applied in the wrapper on
    # the sliced (B, 2) result (removes per-tile transcendentals on 128 lanes).
    z = jnp.dot(h1, w2, preferred_element_type=jnp.float32) + b2
    o_ref[...] = z[:, :out_pad]


# ---------------------------------------------------------------------------
# Parameter packing (done once, outside the kernel)
# ---------------------------------------------------------------------------
def pack_params(params, input_dim, hidden_dims, out_dim=2):
    """Zero-pad to lane-dense widths and pack into one weight slab + one bias slab.

    Padding is exact: extra W columns/rows and bias entries are zero, so padded
    hidden units stay at relu(0)=0 and never affect the real outputs; padded
    output columns are sliced off in the wrapper.
    """
    w0, b0, w1, b1, w2, b2 = params
    in_pad = _round_up(input_dim, SUBLANE)
    hid_pad = _round_up(hidden_dims, LANE)

    w_packed = jnp.zeros((in_pad + 2 * hid_pad, hid_pad), jnp.float32)
    w_packed = w_packed.at[:input_dim, :hidden_dims].set(w0)
    w_packed = w_packed.at[in_pad:in_pad + hidden_dims, :hidden_dims].set(w1)
    w_packed = w_packed.at[in_pad + hid_pad:in_pad + hid_pad + hidden_dims, :out_dim].set(w2)

    b_packed = jnp.zeros((SUBLANE, hid_pad), jnp.float32)
    b_packed = b_packed.at[0, :hidden_dims].set(jnp.reshape(b0, (-1,)))
    b_packed = b_packed.at[1, :hidden_dims].set(jnp.reshape(b1, (-1,)))
    b_packed = b_packed.at[2, :out_dim].set(jnp.reshape(b2, (-1,)))

    dims = (input_dim, in_pad, hid_pad, out_dim)
    return w_packed, b_packed, dims


# ---------------------------------------------------------------------------
# Tile selection
# ---------------------------------------------------------------------------
def _pick_tile(B, batch_tile):
    """Pick a batch tile: big tiles to amortize per-grid-step overhead, but keep
    >=2 grid steps when possible so v7x's 2 TensorCores both get work."""
    if B > batch_tile:
        tb = batch_tile                         # grid >= 2 guaranteed after padding
    elif B >= 2 * SUBLANE:
        tb = _round_up(-(-B // 2), SUBLANE)     # split moderate batches in two
    else:
        tb = _round_up(max(B, 1), SUBLANE)      # tiny batch: one small tile
    return tb, _round_up(B, tb)


# ---------------------------------------------------------------------------
# Pure-XLA fallback (for tiny batches where a kernel launch isn't worth it)
# ---------------------------------------------------------------------------
def _fcca_xla(x, packed):
    w, b, (in_dim, in_pad, hid_pad, out_dim) = packed
    x = x.astype(jnp.float32)
    h0 = jax.nn.relu(x @ w[:in_dim, :] + b[0])
    h1 = jax.nn.relu(h0 @ w[in_pad:in_pad + hid_pad, :] + b[1])
    z = h1 @ w[in_pad + hid_pad:in_pad + 2 * hid_pad, :out_dim] + b[2, :out_dim]
    return 1.0 + jax.nn.softplus(z)


# ---------------------------------------------------------------------------
# Wrapper
# ---------------------------------------------------------------------------
def fcca_forward(x, packed, *, batch_tile=1024, small_batch_xla_threshold=0):
    """x: (B, input_dim) f32. Returns (B, 2) f32: [:, 0]=alpha, [:, 1]=beta."""
    w_packed, b_packed, (in_dim, in_pad, hid_pad, out_dim) = packed
    B = x.shape[0]

    # Optional: for tiny batches the whole call is one grid step dominated by
    # launch + DMA latency; plain XLA is as fast.  Off by default.
    if B < small_batch_xla_threshold:
        return _fcca_xla(x, packed)

    tb, B_pad = _pick_tile(B, batch_tile)

    # Single pad op (batch remainder + feature padding), no zeros+scatter pass.
    x_f = x.astype(jnp.float32)
    pad_b, pad_d = B_pad - B, in_pad - in_dim
    x_p = jnp.pad(x_f, ((0, pad_b), (0, pad_d))) if (pad_b or pad_d) else x_f

    w_rows = w_packed.shape[0]
    grid = (B_pad // tb,)

    kernel = functools.partial(
        fcca_kernel, in_pad=in_pad, hid_pad=hid_pad, out_pad=OUT_PAD)

    cost = pl.CostEstimate(
        flops=2 * B_pad * (in_pad * hid_pad + hid_pad * hid_pad + hid_pad * OUT_PAD),
        transcendentals=0,  # softplus epilogue moved to the wrapper
        bytes_accessed=4 * (x_p.size + w_packed.size + b_packed.size
                            + B_pad * OUT_PAD),
    )

    z = pl.pallas_call(
        kernel,
        out_shape=jax.ShapeDtypeStruct((B_pad, OUT_PAD), jnp.float32),
        grid=grid,
        in_specs=[
            # activations: tiled over the batch grid axis (auto double-buffered)
            pl.BlockSpec((tb, in_pad), lambda i: (i, 0)),
            # packed weights / biases: constant index_map -> loaded once, resident
            pl.BlockSpec((w_rows, hid_pad), lambda i: (0, 0)),
            pl.BlockSpec((SUBLANE, hid_pad), lambda i: (0, 0)),
        ],
        # narrow output block: last dim equals the full array dim (8) -> legal,
        # and HBM writeback is 16x smaller than the old (B_pad, 128) slab.
        out_specs=pl.BlockSpec((tb, OUT_PAD), lambda i: (i, 0)),
        compiler_params=pltpu.CompilerParams(
            dimension_semantics=("parallel",),   # megacore sharding on v7x
            vmem_limit_bytes=32 << 20,           # plenty even at tb=1024
        ),
        cost_estimate=cost,
    )(x_p, w_packed, b_packed)

    # Epilogue on the real (B, 2) slice only.
    return 1.0 + jax.nn.softplus(z[:B, :out_dim])


# ---------------------------------------------------------------------------
# Init (mimics torch.nn.Linear default: U[-1/sqrt(fan_in), 1/sqrt(fan_in)])
# ---------------------------------------------------------------------------
def init_params(key, input_dim, hidden_dims, out_dim=2):
    ks = jax.random.split(key, 6)

    def lin(kw, kb, fan_in, fan_out):
        bound = 1.0 / jnp.sqrt(float(fan_in))
        w = jax.random.uniform(kw, (fan_in, fan_out), jnp.float32, -bound, bound)
        b = jax.random.uniform(kb, (fan_out,), jnp.float32, -bound, bound)
        return w, b

    w0, b0 = lin(ks[0], ks[1], input_dim, hidden_dims)
    w1, b1 = lin(ks[2], ks[3], hidden_dims, hidden_dims)
    w2, b2 = lin(ks[4], ks[5], hidden_dims, out_dim)
    return (w0, b0, w1, b1, w2, b2)


def fcca_reference(x, params):
    w0, b0, w1, b1, w2, b2 = params
    h0 = jax.nn.relu(x @ w0 + b0)
    h1 = jax.nn.relu(h0 @ w1 + b1)
    return 1.0 + jax.nn.softplus(h1 @ w2 + b2)


if __name__ == "__main__":
    key = jax.random.PRNGKey(0)
    k_x, k_x2, k_p = jax.random.split(key, 3)

    input_dim = 32    # number of pressure sensors (small synthetic size)
    hidden_dims = 64  # as in the PyTorch module

    params = init_params(k_p, input_dim, hidden_dims)
    packed = pack_params(params, input_dim, hidden_dims)

    # Small batch (single grid step).
    x = jax.random.normal(k_x, (8, input_dim), jnp.float32)
    out = jax.block_until_ready(fcca_forward(x, packed))
    ref = fcca_reference(x, params)
    assert out.shape == (8, 2)
    assert jnp.allclose(out, ref, atol=1e-5, rtol=1e-5), "mismatch vs reference (B=8)"

    # Larger batch: exercises a multi-step batch grid (2 tiles) + remainder padding.
    x2 = jax.random.normal(k_x2, (200, input_dim), jnp.float32)
    out2 = jax.block_until_ready(fcca_forward(x2, packed))
    ref2 = fcca_reference(x2, params)
    assert out2.shape == (200, 2)
    assert jnp.allclose(out2, ref2, atol=1e-5, rtol=1e-5), "mismatch vs reference (B=200)"

    print("KERNEL_OK")
</pallas_src>

<mosaic_0001>
module attributes {stable_mosaic.version = 11 : i64} {
  func.func @fcca_kernel(%arg0: i32, %arg1: memref<8x32xf32, #tpu.memory_space<vmem>>, %arg2: memref<288x128xf32, #tpu.memory_space<vmem>>, %arg3: memref<8x128xf32, #tpu.memory_space<vmem>>, %arg4: memref<8x8xf32, #tpu.memory_space<vmem>>) attributes {dimension_semantics = [#tpu.dimension_semantics<parallel>], iteration_bounds = array<i64: 1>, scalar_prefetch = 0 : i64, scratch_operands = 0 : i64, tpu.core_type = #tpu.core_type<tc>, window_params = [{transform_indices = @transform_0, window_bounds = array<i64: 8, 32>}, {pipeline_mode = #tpu.pipeline_mode<synchronous>, transform_indices = @transform_1, window_bounds = array<i64: 288, 128>}, {pipeline_mode = #tpu.pipeline_mode<synchronous>, transform_indices = @transform_2, window_bounds = array<i64: 8, 128>}, {transform_indices = @transform_3, window_bounds = array<i64: 8, 8>}]} {
    %c0 = arith.constant 0 : index
    %c0_0 = arith.constant 0 : index
    %0 = vector.load %arg1[%c0, %c0_0] : memref<8x32xf32, #tpu.memory_space<vmem>>, vector<8x32xf32>
    %c0_1 = arith.constant 0 : index
    %c0_2 = arith.constant 0 : index
    %1 = vector.load %arg2[%c0_1, %c0_2] : memref<288x128xf32, #tpu.memory_space<vmem>>, vector<32x128xf32>
    %c32 = arith.constant 32 : index
    %c0_3 = arith.constant 0 : index
    %2 = vector.load %arg2[%c32, %c0_3] : memref<288x128xf32, #tpu.memory_space<vmem>>, vector<128x128xf32>
    %c160 = arith.constant 160 : index
    %c0_4 = arith.constant 0 : index
    %3 = vector.load %arg2[%c160, %c0_4] : memref<288x128xf32, #tpu.memory_space<vmem>>, vector<128x128xf32>
    %c0_5 = arith.constant 0 : index
    %c0_6 = arith.constant 0 : index
    %4 = vector.load %arg3[%c0_5, %c0_6] : memref<8x128xf32, #tpu.memory_space<vmem>>, vector<1x128xf32>
    %c1 = arith.constant 1 : index
    %c0_7 = arith.constant 0 : index
    %5 = vector.load %arg3[%c1, %c0_7] : memref<8x128xf32, #tpu.memory_space<vmem>>, vector<1x128xf32>
    %c2 = arith.constant 2 : index
    %c0_8 = arith.constant 0 : index
    %6 = vector.load %arg3[%c2, %c0_8] : memref<8x128xf32, #tpu.memory_space<vmem>>, vector<1x128xf32>
    %cst = arith.constant dense<0.000000e+00> : vector<8x128xf32>
    %7 = tpu.matmul %0, %1, %cst {dimension_numbers = #tpu.dot_dimension_numbers<[1], [0], [0], [1], [0, 0, 1, 1], [], []>} : vector<8x32xf32>, vector<32x128xf32>, vector<8x128xf32> -> vector<8x128xf32>
    %8 = vector.broadcast %4 : vector<1x128xf32> to vector<8x128xf32>
    %9 = arith.addf %7, %8 : vector<8x128xf32>
    %cst_9 = arith.constant 0.000000e+00 : f32
    %10 = vector.broadcast %cst_9 : f32 to vector<8x128xf32>
    %11 = arith.maximumf %9, %10 : vector<8x128xf32>
    %cst_10 = arith.constant dense<0.000000e+00> : vector<8x128xf32>
    %12 = tpu.matmul %11, %2, %cst_10 {dimension_numbers = #tpu.dot_dimension_numbers<[1], [0], [0], [1], [0, 0, 1, 1], [], []>} : vector<8x128xf32>, vector<128x128xf32>, vector<8x128xf32> -> vector<8x128xf32>
    %13 = vector.broadcast %5 : vector<1x128xf32> to vector<8x128xf32>
    %14 = arith.addf %12, %13 : vector<8x128xf32>
    %cst_11 = arith.constant 0.000000e+00 : f32
    %15 = vector.broadcast %cst_11 : f32 to vector<8x128xf32>
    %16 = arith.maximumf %14, %15 : vector<8x128xf32>
    %cst_12 = arith.constant dense<0.000000e+00> : vector<8x128xf32>
    %17 = tpu.matmul %16, %3, %cst_12 {dimension_numbers = #tpu.dot_dimension_numbers<[1], [0], [0], [1], [0, 0, 1, 1], [], []>} : vector<8x128xf32>, vector<128x128xf32>, vector<8x128xf32> -> vector<8x128xf32>
    %18 = vector.broadcast %6 : vector<1x128xf32> to vector<8x128xf32>
    %19 = arith.addf %17, %18 : vector<8x128xf32>
    %20 = vector.extract_strided_slice %19 {offsets = [0, 0], sizes = [8, 8], strides = [1, 1]} : vector<8x128xf32> to vector<8x8xf32>
    %c0_13 = arith.constant 0 : index
    %c0_14 = arith.constant 0 : index
    %21 = vector.load %arg4[%c0_13, %c0_14] : memref<8x8xf32, #tpu.memory_space<vmem>>, vector<8x8xf32>
    tpu.vector_store %arg4[%c0_13, %c0_14], %20 {strides = array<i32>} : memref<8x8xf32, #tpu.memory_space<vmem>>, vector<8x8xf32>,
    return
  }
  func.func @transform_0(%arg0: i32) -> (i32, i32) {
    %c0_i32 = arith.constant 0 : i32
    %c0_i32_0 = arith.constant 0 : i32
    return %arg0, %c0_i32 : i32, i32
  }
  func.func @transform_1(%arg0: i32) -> (i32, i32) {
    %c0_i32 = arith.constant 0 : i32
    %c0_i32_0 = arith.constant 0 : i32
    %c0_i32_1 = arith.constant 0 : i32
    return %c0_i32, %c0_i32_0 : i32, i32
  }
  func.func @transform_2(%arg0: i32) -> (i32, i32) {
    %c0_i32 = arith.constant 0 : i32
    %c0_i32_0 = arith.constant 0 : i32
    %c0_i32_1 = arith.constant 0 : i32
    return %c0_i32, %c0_i32_0 : i32, i32
  }
  func.func @transform_3(%arg0: i32) -> (i32, i32) {
    %c0_i32 = arith.constant 0 : i32
    %c0_i32_0 = arith.constant 0 : i32
    return %arg0, %c0_i32 : i32, i32
  }
}

</mosaic_0001>

<llo_original>
// kernel: tpu_custom_call.1
$region0: #{tpu_custom_call.1}
  #allocation0 [shape = 'u32[]', space=smem, size = 0x4, offset = 0x4, fixed_abs, tag = 'smem constant byte address 0x4 - core index']
  #allocation1 [shape = 'u32[144,128]{1,0:T(1,128)}', space=vmem, size = 0x12000, scoped, tag = 'internal scratch']
  %s0 = inlined_call_operand.hbm [shape: f32[8,32], index: 0, kind: input, shape index: {}]
  %s1 = inlined_call_operand.hbm [shape: f32[288,128], index: 1, kind: input, shape index: {}]
  %s2 = inlined_call_operand.hbm [shape: f32[8,128], index: 2, kind: input, shape index: {}]
  %s3 = inlined_call_operand.hbm [shape: f32[8,8], index: 3, kind: output, shape index: {}]
  %s4 = sld [smem:[#allocation0]]
  $region34: #{tpu_custom_call.1} parent=0
    _
  %s6 = ssub.s32 1, %s4
  %s7 = scalar_select 0, %s6, %s4
  $region1: #{tpu_custom_call.1} parent=0
    #allocation2 [shape = 'u8[4096]{0}', space=vmem, size = 0x1000, scoped, tag = 'input window, operand 0, single buffered']
    #allocation3 [shape = 's32[1]{0}', space=sflag, size = 0x4, scoped, tag = 'scoped memory for tpu_custom_call.1']
    #allocation4 [shape = 's32[1]{0}', space=sflag, size = 0x4, scoped, tag = 'scoped memory for tpu_custom_call.1']
    #allocation5 [shape = 'u8[147456]{0}', space=vmem, size = 0x24000, scoped, tag = 'input window, operand 1, single buffered']
    #allocation6 [shape = 's32[1]{0}', space=sflag, size = 0x4, scoped, tag = 'scoped memory for tpu_custom_call.1']
    #allocation7 [shape = 'u8[4096]{0}', space=vmem, size = 0x1000, scoped, tag = 'input window, operand 2, single buffered']
    #allocation8 [shape = 'u8[4096]{0}', space=vmem, size = 0x1000, scoped, tag = 'output window, operand 0, single buffered']
    %8 = vsyncpa [#allocation3], 0
    %9 = vsyncpa [#allocation6], 0
    %10 = vsyncpa [#allocation4], 0
    // Predicated region
    $region2: #{tpu_custom_call.1} parent=1 // pred_check
      _
    $region3: #{tpu_custom_call.1} parent=1 // pred_check_branch
      %12 = sbr.rel (0) target = $region5
    $region4: #{tpu_custom_call.1} parent=1 // pred_region
      %s14 = ssub.s32 128, 128
      %15 = vsyncadd [#allocation3], %s14
      %s17 = sshll.u32 [#allocation2], 4
      %s18 = int_to_ptr.vmem [resolvable:$true] %s17
      %20 = dma.hbm_to_vmem [thread:$0]  %s0, 128, %s18, [#allocation3]
    $region5: #{tpu_custom_call.1} parent=1 // pred_fallthru
      _
    // Predicated region
    $region6: #{tpu_custom_call.1} parent=1 // pred_check
      _
    $region7: #{tpu_custom_call.1} parent=1 // pred_check_branch
      %22 = sbr.rel (0) target = $region9
    $region8: #{tpu_custom_call.1} parent=1 // pred_region
      %s24 = ssub.s32 4608, 4608
      %25 = vsyncadd [#allocation6], %s24
      %s26 = sshll.u32 [#allocation5], 4
      %s27 = int_to_ptr.vmem [resolvable:$true] %s26
      %32 = dma.hbm_to_vmem [thread:$0]  %s1, 4608, %s27, [#allocation6], 128, 128, 8
    $region9: #{tpu_custom_call.1} parent=1 // pred_fallthru
      _
    // Predicated region
    $region10: #{tpu_custom_call.1} parent=1 // pred_check
      _
    $region11: #{tpu_custom_call.1} parent=1 // pred_check_branch
      %34 = sbr.rel (0) target = $region13
    $region12: #{tpu_custom_call.1} parent=1 // pred_region
      %s36 = ssub.s32 128, 128
      %37 = vsyncadd [#allocation6], %s36
      %s39 = sshll.u32 [#allocation7], 4
      %s40 = int_to_ptr.vmem [resolvable:$true] %s39
      %42 = dma.hbm_to_vmem [thread:$0]  %s2, 128, %s40, [#allocation6]
    $region13: #{tpu_custom_call.1} parent=1 // pred_fallthru
      _
    // Predicated region
    $region14: #{tpu_custom_call.1} parent=1 // pred_check
      _
    $region15: #{tpu_custom_call.1} parent=1 // pred_check_branch
      %44 = sbr.rel (0) target = $region17
    $region16: #{tpu_custom_call.1} parent=1 // pred_region
      %45 = dma.done [#allocation3], 128
    $region17: #{tpu_custom_call.1} parent=1 // pred_fallthru
      _
    // Predicated region
    $region18: #{tpu_custom_call.1} parent=1 // pred_check
      _
    $region19: #{tpu_custom_call.1} parent=1 // pred_check_branch
      %47 = sbr.rel (0) target = $region21
    $region20: #{tpu_custom_call.1} parent=1 // pred_region
      %48 = dma.done [#allocation6], 4608
    $region21: #{tpu_custom_call.1} parent=1 // pred_fallthru
      _
    // Predicated region
    $region22: #{tpu_custom_call.1} parent=1 // pred_check
      _
    $region23: #{tpu_custom_call.1} parent=1 // pred_check_branch
      %50 = sbr.rel (0) target = $region25
    $region24: #{tpu_custom_call.1} parent=1 // pred_region
      %51 = dma.done [#allocation6], 128
    $region25: #{tpu_custom_call.1} parent=1 // pred_fallthru
      _
    %v52 = vld [vmem:[#allocation2] sm:$0xff]
    %v53 = vld [vmem:[#allocation5] sm:$0xff]
    %v54 = vld [vmem:[#allocation5 + $0x8] sm:$0xff]
    %v55 = vld [vmem:[#allocation5 + $0x10] sm:$0xff]
    %v56 = vld [vmem:[#allocation5 + $0x18] sm:$0xff]
    %v57 = vld [vmem:[#allocation5 + $0x20] sm:$0xff]
    %v58 = vld [vmem:[#allocation5 + $0x28] sm:$0xff]
    %v59 = vld [vmem:[#allocation5 + $0x30] sm:$0xff]
    %v60 = vld [vmem:[#allocation5 + $0x38] sm:$0xff]
    %v61 = vld [vmem:[#allocation5 + $0x40] sm:$0xff]
    %v62 = vld [vmem:[#allocation5 + $0x48] sm:$0xff]
    %v63 = vld [vmem:[#allocation5 + $0x50] sm:$0xff]
    %v64 = vld [vmem:[#allocation5 + $0x58] sm:$0xff]
    %v65 = vld [vmem:[#allocation5 + $0x60] sm:$0xff]
    %v66 = vld [vmem:[#allocation5 + $0x68] sm:$0xff]
    %v67 = vld [vmem:[#allocation5 + $0x70] sm:$0xff]
    %v68 = vld [vmem:[#allocation5 + $0x78] sm:$0xff]
    %v69 = vld [vmem:[#allocation5 + $0x80] sm:$0xff]
    %v70 = vld [vmem:[#allocation5 + $0x88] sm:$0xff]
    %v71 = vld [vmem:[#allocation5 + $0x90] sm:$0xff]
    %v72 = vld [vmem:[#allocation5 + $0x98] sm:$0xff]
    %v73 = vld [vmem:[#allocation5 + $0xa0] sm:$0xff]
    %v74 = vld [vmem:[#allocation5 + $0xa8] sm:$0xff]
    %v75 = vld [vmem:[#allocation5 + $0xb0] sm:$0xff]
    %v76 = vld [vmem:[#allocation5 + $0xb8] sm:$0xff]
    %v77 = vld [vmem:[#allocation5 + $0xc0] sm:$0xff]
    %v78 = vld [vmem:[#allocation5 + $0xc8] sm:$0xff]
    %v79 = vld [vmem:[#allocation5 + $0xd0] sm:$0xff]
    %v80 = vld [vmem:[#allocation5 + $0xd8] sm:$0xff]
    %v81 = vld [vmem:[#allocation5 + $0xe0] sm:$0xff]
    %v82 = vld [vmem:[#allocation5 + $0xe8] sm:$0xff]
    %v83 = vld [vmem:[#allocation5 + $0xf0] sm:$0xff]
    %v84 = vld [vmem:[#allocation5 + $0xf8] sm:$0xff]
    %v85 = vld [vmem:[#allocation5 + $0x100] sm:$0xff]
    %v86 = vld [vmem:[#allocation5 + $0x108] sm:$0xff]
    %v87 = vld [vmem:[#allocation5 + $0x110] sm:$0xff]
    %v88 = vld [vmem:[#allocation5 + $0x118] sm:$0xff]
    %v89 = vld [vmem:[#allocation7] sm:$0x1]
    %v90 = vld [vmem:[#allocation7 + $0x1] sm:$0x1]
    %v91 = vld [vmem:[#allocation7 + $0x2] sm:$0x1]
    %v92 = vlaneseq
    %v93 = vshrl.u32 %v92, 7
    %v94 = vsub.s32 0, %v93
    %v95 = vrot.slane %v89, %v94
    %vm96 = vcmask 261120
    %v98 = vsel %vm96, %v52, 0
    %100 = vmatprep.subr.mxu0 0.0
    %101 = vmatpush1.msra.mxu0 %v53
    %102 = vmatprep.subr.mxu0 0.0
    %103 = vmatpush1.msra.mxu0 %v54
    %104 = vmatprep.subr.mxu0 0.0
    %105 = vmatpush1.msra.mxu0 %v55
    %106 = vmatprep.subr.mxu0 0.0
    %107 = vmatpush1.msra.mxu0 %v56
    %108 = vmatprep.subr.mxu0 0.0
    %109 = vmatpush1.msra.mxu0 0.0
    %110 = vmatprep.subr.mxu0 0.0
    %111 = vmatpush1.msra.mxu0 0.0
    %112 = vmatprep.subr.mxu0 0.0
    %113 = vmatpush1.msra.mxu0 0.0
    %114 = vmatprep.subr.mxu0 0.0
    %115 = vmatpush1.msra.mxu0 0.0
    %116 = vmatprep.subr.mxu0 0.0
    %117 = vmatpush1.msra.mxu0 0.0
    %118 = vmatprep.subr.mxu0 0.0
    %119 = vmatpush1.msra.mxu0 0.0
    %120 = vmatprep.subr.mxu0 0.0
    %121 = vmatpush1.msra.mxu0 0.0
    %122 = vmatprep.subr.mxu0 0.0
    %123 = vmatpush1.msra.mxu0 0.0
    %124 = vmatprep.subr.mxu0 0.0
    %125 = vmatpush1.msra.mxu0 0.0
    %126 = vmatprep.subr.mxu0 0.0
    %127 = vmatpush1.msra.mxu0 0.0
    %128 = vmatprep.subr.mxu0 0.0
    %129 = vmatpush1.msra.mxu0 0.0
    %130 = vmatprep.subr.mxu0 0.0
    %131 = vmatpush1.msra.mxu0 0.0
    %132 = vmatprep.subr.mxu0 0.0
    %133 = vmatpush1.msra.mxu0 0.0
    %134 = vmatprep.subr.mxu0 0.0
    %135 = vmatpush1.msra.mxu0 0.0
    %136 = vmatprep.subr.mxu0 0.0
    %137 = vmatpush1.msra.mxu0 0.0
    %138 = vmatprep.subr.mxu0 0.0
    %139 = vmatpush1.msra.mxu0 0.0
    %140 = vmatprep.subr.mxu0 0.0
    %141 = vmatpush1.msra.mxu0 0.0
    %142 = vmatprep.subr.mxu0 0.0
    %143 = vmatpush1.msra.mxu0 0.0
    %144 = vmatprep.subr.mxu0 0.0
    %145 = vmatpush1.msra.mxu0 0.0
    %146 = vmatprep.subr.mxu0 0.0
    %147 = vmatpush1.msra.mxu0 0.0
    %148 = vmatprep.subr.mxu0 0.0
    %149 = vmatpush1.msra.mxu0 0.0
    %150 = vmatprep.subr.mxu0 0.0
    %151 = vmatpush1.msra.mxu0 0.0
    %152 = vmatprep.subr.mxu0 0.0
    %153 = vmatpush1.msra.mxu0 0.0
    %154 = vmatprep.subr.mxu0 0.0
    %155 = vmatpush1.msra.mxu0 0.0
    %156 = vmatprep.subr.mxu0 0.0
    %157 = vmatpush1.msra.mxu0 0.0
    %158 = vmatprep.subr.mxu0 0.0
    %159 = vmatpush1.msra.mxu0 0.0
    %160 = vmatprep.subr.mxu0 0.0
    %161 = vmatpush1.msra.mxu0 0.0
    %162 = vmatprep.subr.mxu0 0.0
    %163 = vmatpush1.msra.mxu0 0.0
    %164 = vmatprep.mubr.f32.mxu0 0.0
    %165 = vmatmul.mubr.f32.gmra.mrb[0].mxu0 %v98
    %v166 = vpop.f32.mrb[0].mxu0
    %v167 = vadd.f32 %v95, %v166
    %v168 = vpop.f32.mrb[0].mxu0
    %169 = vdwg.mxu0
    %v170 = vmax.f32 %v167, 0.0
    %v171 = vlaneseq
    %v172 = vshrl.u32 %v171, 7
    %v173 = vsub.s32 0, %v172
    %v174 = vrot.slane %v90, %v173
    %175 = vmatprep.subr.mxu0 0.0
    %176 = vmatpush1.msra.mxu0 %v57
    %177 = vmatprep.subr.mxu0 0.0
    %178 = vmatpush1.msra.mxu0 %v58
    %179 = vmatprep.subr.mxu0 0.0
    %180 = vmatpush1.msra.mxu0 %v59
    %181 = vmatprep.subr.mxu0 0.0
    %182 = vmatpush1.msra.mxu0 %v60
    %183 = vmatprep.subr.mxu0 0.0
    %184 = vmatpush1.msra.mxu0 %v61
    %185 = vmatprep.subr.mxu0 0.0
    %186 = vmatpush1.msra.mxu0 %v62
    %187 = vmatprep.subr.mxu0 0.0
    %188 = vmatpush1.msra.mxu0 %v63
    %189 = vmatprep.subr.mxu0 0.0
    %190 = vmatpush1.msra.mxu0 %v64
    %191 = vmatprep.subr.mxu0 0.0
    %192 = vmatpush1.msra.mxu0 %v65
    %193 = vmatprep.subr.mxu0 0.0
    %194 = vmatpush1.msra.mxu0 %v66
    %195 = vmatprep.subr.mxu0 0.0
    %196 = vmatpush1.msra.mxu0 %v67
    %197 = vmatprep.subr.mxu0 0.0
    %198 = vmatpush1.msra.mxu0 %v68
    %199 = vmatprep.subr.mxu0 0.0
    %200 = vmatpush1.msra.mxu0 %v69
    %201 = vmatprep.subr.mxu0 0.0
    %202 = vmatpush1.msra.mxu0 %v70
    %203 = vmatprep.subr.mxu0 0.0
    %204 = vmatpush1.msra.mxu0 %v71
    %205 = vmatprep.subr.mxu0 0.0
    %206 = vmatpush1.msra.mxu0 %v72
    %207 = vmatprep.subr.mxu0 0.0
    %208 = vmatpush1.msra.mxu0 0.0
    %209 = vmatprep.subr.mxu0 0.0
    %210 = vmatpush1.msra.mxu0 0.0
    %211 = vmatprep.subr.mxu0 0.0
    %212 = vmatpush1.msra.mxu0 0.0
    %213 = vmatprep.subr.mxu0 0.0
    %214 = vmatpush1.msra.mxu0 0.0
    %215 = vmatprep.subr.mxu0 0.0
    %216 = vmatpush1.msra.mxu0 0.0
    %217 = vmatprep.subr.mxu0 0.0
    %218 = vmatpush1.msra.mxu0 0.0
    %219 = vmatprep.subr.mxu0 0.0
    %220 = vmatpush1.msra.mxu0 0.0
    %221 = vmatprep.subr.mxu0 0.0
    %222 = vmatpush1.msra.mxu0 0.0
    %223 = vmatprep.subr.mxu0 0.0
    %224 = vmatpush1.msra.mxu0 0.0
    %225 = vmatprep.subr.mxu0 0.0
    %226 = vmatpush1.msra.mxu0 0.0
    %227 = vmatprep.subr.mxu0 0.0
    %228 = vmatpush1.msra.mxu0 0.0
    %229 = vmatprep.subr.mxu0 0.0
    %230 = vmatpush1.msra.mxu0 0.0
    %231 = vmatprep.subr.mxu0 0.0
    %232 = vmatpush1.msra.mxu0 0.0
    %233 = vmatprep.subr.mxu0 0.0
    %234 = vmatpush1.msra.mxu0 0.0
    %235 = vmatprep.subr.mxu0 0.0
    %236 = vmatpush1.msra.mxu0 0.0
    %237 = vmatprep.subr.mxu0 0.0
    %238 = vmatpush1.msra.mxu0 0.0
    %239 = vmatprep.mubr.f32.mxu0 0.0
    %240 = vmatmul.mubr.f32.gmra.mrb[0].mxu0 %v170
    %v241 = vpop.f32.mrb[0].mxu0
    %v242 = vadd.f32 %v174, %v241
    %v243 = vpop.f32.mrb[0].mxu0
    %244 = vdwg.mxu0
    %v245 = vmax.f32 %v242, 0.0
    %v246 = vlaneseq
    %v247 = vshrl.u32 %v246, 7
    %v248 = vsub.s32 0, %v247
    %v249 = vrot.slane %v91, %v248
    %250 = vmatprep.subr.mxu0 0.0
    %251 = vmatpush1.msra.mxu0 %v73
    %252 = vmatprep.subr.mxu0 0.0
    %253 = vmatpush1.msra.mxu0 %v74
    %254 = vmatprep.subr.mxu0 0.0
    %255 = vmatpush1.msra.mxu0 %v75
    %256 = vmatprep.subr.mxu0 0.0
    %257 = vmatpush1.msra.mxu0 %v76
    %258 = vmatprep.subr.mxu0 0.0
    %259 = vmatpush1.msra.mxu0 %v77
    %260 = vmatprep.subr.mxu0 0.0
    %261 = vmatpush1.msra.mxu0 %v78
    %262 = vmatprep.subr.mxu0 0.0
    %263 = vmatpush1.msra.mxu0 %v79
    %264 = vmatprep.subr.mxu0 0.0
    %265 = vmatpush1.msra.mxu0 %v80
    %266 = vmatprep.subr.mxu0 0.0
    %267 = vmatpush1.msra.mxu0 %v81
    %268 = vmatprep.subr.mxu0 0.0
    %269 = vmatpush1.msra.mxu0 %v82
    %270 = vmatprep.subr.mxu0 0.0
    %271 = vmatpush1.msra.mxu0 %v83
    %272 = vmatprep.subr.mxu0 0.0
    %273 = vmatpush1.msra.mxu0 %v84
    %274 = vmatprep.subr.mxu0 0.0
    %275 = vmatpush1.msra.mxu0 %v85
    %276 = vmatprep.subr.mxu0 0.0
    %277 = vmatpush1.msra.mxu0 %v86
    %278 = vmatprep.subr.mxu0 0.0
    %279 = vmatpush1.msra.mxu0 %v87
    %280 = vmatprep.subr.mxu0 0.0
    %281 = vmatpush1.msra.mxu0 %v88
    %282 = vmatprep.subr.mxu0 0.0
    %283 = vmatpush1.msra.mxu0 0.0
    %284 = vmatprep.subr.mxu0 0.0
    %285 = vmatpush1.msra.mxu0 0.0
    %286 = vmatprep.subr.mxu0 0.0
    %287 = vmatpush1.msra.mxu0 0.0
    %288 = vmatprep.subr.mxu0 0.0
    %289 = vmatpush1.msra.mxu0 0.0
    %290 = vmatprep.subr.mxu0 0.0
    %291 = vmatpush1.msra.mxu0 0.0
    %292 = vmatprep.subr.mxu0 0.0
    %293 = vmatpush1.msra.mxu0 0.0
    %294 = vmatprep.subr.mxu0 0.0
    %295 = vmatpush1.msra.mxu0 0.0
    %296 = vmatprep.subr.mxu0 0.0
    %297 = vmatpush1.msra.mxu0 0.0
    %298 = vmatprep.subr.mxu0 0.0
    %299 = vmatpush1.msra.mxu0 0.0
    %300 = vmatprep.subr.mxu0 0.0
    %301 = vmatpush1.msra.mxu0 0.0
    %302 = vmatprep.subr.mxu0 0.0
    %303 = vmatpush1.msra.mxu0 0.0
    %304 = vmatprep.subr.mxu0 0.0
    %305 = vmatpush1.msra.mxu0 0.0
    %306 = vmatprep.subr.mxu0 0.0
    %307 = vmatpush1.msra.mxu0 0.0
    %308 = vmatprep.subr.mxu0 0.0
    %309 = vmatpush1.msra.mxu0 0.0
    %310 = vmatprep.subr.mxu0 0.0
    %311 = vmatpush1.msra.mxu0 0.0
    %312 = vmatprep.subr.mxu0 0.0
    %313 = vmatpush1.msra.mxu0 0.0
    %314 = vmatprep.mubr.f32.mxu0 0.0
    %315 = vmatmul.mubr.f32.gmra.mrb[0].mxu0 %v245
    %v316 = vpop.f32.mrb[0].mxu0
    %v317 = vadd.f32 %v249, %v316
    %v318 = vpop.f32.mrb[0].mxu0
    %319 = vdwg.mxu0
    %vm320 = vcmask 64512
    %321 = vst.msk [vmem:[#allocation8] sm:$0xff] %vm320, %v317
    // Predicated region
    $region26: #{tpu_custom_call.1} parent=1 // pred_check
      _
    $region27: #{tpu_custom_call.1} parent=1 // pred_check_branch
      %323 = sbr.rel (0) target = $region29
    $region28: #{tpu_custom_call.1} parent=1 // pred_region
      %s325 = ssub.s32 128, 128
      %326 = vsyncadd [#allocation4], %s325
      %s328 = sshll.u32 [#allocation8], 4
      %s329 = int_to_ptr.vmem [resolvable:$true] %s328
      %331 = dma.vmem_to_hbm [thread:$0]  %s329, 128, %s3, [#allocation4]
    $region29: #{tpu_custom_call.1} parent=1 // pred_fallthru
      _
    // Predicated region
    $region30: #{tpu_custom_call.1} parent=1 // pred_check
      _
    $region31: #{tpu_custom_call.1} parent=1 // pred_check_branch
      %333 = sbr.rel (0) target = $region33
    $region32: #{tpu_custom_call.1} parent=1 // pred_region
      %334 = dma.done [#allocation4], 128
    $region33: #{tpu_custom_call.1} parent=1 // pred_fallthru
      _
    %335 = vsyncpa [#allocation3], 1
    %336 = vsyncpa [#allocation6], 1
    %337 = vsyncpa [#allocation4], 1

</llo_original>
